<compile_context>
chip_gen: v6e
topology: v6e:2x2x1
jax: 0.10.0
libtpu: 0.0.40
codegen_flags: <defaults>
</compile_context>

<pallas_src>
import functools

import jax
import jax.numpy as jnp
from jax.experimental import pallas as pl
from jax.experimental.pallas import tpu as pltpu


def _round_up(x, m):
    return ((x + m - 1) // m) * m


def _sigmoid(x):
    # Numerically stable sigmoid: exp() only ever sees a non-positive
    # argument, so no inf intermediates; exp lands on the EUP slot.
    z = jnp.exp(-jnp.abs(x))
    return jnp.where(x >= 0, 1.0 / (1.0 + z), z / (1.0 + z))


def decoder_kernel(tok_ref, embed_ref, w_ref, b_ref, out_ref, hc_ref, *,
                   hidden, e_rows, h_rows):
    """Fused single-step decoder: one-hot MXU embedding gather -> two
    packed-gate LSTM cells (zero initial state => recurrent term and forget
    gate vanish) -> Linear head.  Four packed operands, fully VMEM-resident,
    single grid point."""
    B = tok_ref.shape[0]              # padded batch (multiple of 8)
    V_pad = embed_ref.shape[0]
    H = hidden

    # ---- embedding gather as a one-hot matmul (MXU; bounds-safe) -----------
    tok = tok_ref[...]                                              # (B, 1) i32
    lane = jax.lax.broadcasted_iota(jnp.int32, (B, V_pad), 1)
    onehot = (lane == tok).astype(jnp.float32)                      # (B, V_pad)
    emb = jnp.dot(onehot, embed_ref[...],
                  preferred_element_type=jnp.float32)               # (B, E_pad)

    o1 = e_rows                       # row offset of layer-1 gate weights
    o2 = e_rows + h_rows              # row offset of fc weights

    def lstm_cell(x, w_rows, bias):
        # One fused MXU dot over the packed [Wi | Wg | Wo | 0] slab with the
        # bias pre-broadcast to (B, W); static 32-lane slices pick the gates.
        g = jnp.dot(x, w_rows, preferred_element_type=jnp.float32) + bias
        gi = g[:, 0 * H:1 * H]
        gg = g[:, 1 * H:2 * H]
        go = g[:, 2 * H:3 * H]
        c = _sigmoid(gi) * jnp.tanh(gg)
        h = _sigmoid(go) * jnp.tanh(c)
        return h, c

    h0, c0 = lstm_cell(emb, w_ref[0:o1, :], b_ref[0 * B:1 * B, :])   # layer 0
    h1, c1 = lstm_cell(h0, w_ref[o1:o1 + H, :], b_ref[1 * B:2 * B, :])  # layer 1

    # ---- fc head (weights pre-padded to a lane-dense slab) -----------------
    out_ref[...] = (jnp.dot(h1, w_ref[o2:o2 + H, :],
                            preferred_element_type=jnp.float32)
                    + b_ref[2 * B:3 * B, :])

    # ---- single lane-dense packed state output: [h0 | h1 | c0 | c1] --------
    hc_ref[...] = jnp.concatenate([h0, h1, c0, c1], axis=-1)        # (B, 4H)


def init_params(key, input_dim, embed_dim, hidden_dim, output_dim):
    """Deterministic PyTorch-layout parameters (uniform(-1/sqrt(H), 1/sqrt(H)))."""
    ks = jax.random.split(key, 12)
    s = 1.0 / jnp.sqrt(jnp.float32(hidden_dim))
    u = lambda k, shape, scale: jax.random.uniform(
        k, shape, jnp.float32, minval=-scale, maxval=scale)
    return {
        "embed":  jax.random.normal(ks[0], (input_dim, embed_dim), jnp.float32),
        # layer 0: input size = embed_dim; gate order [i, f, g, o]
        "w_ih0":  u(ks[1], (4 * hidden_dim, embed_dim), s),
        "w_hh0":  u(ks[2], (4 * hidden_dim, hidden_dim), s),   # unused: h_prev == 0
        "b_ih0":  u(ks[3], (4 * hidden_dim,), s),
        "b_hh0":  u(ks[4], (4 * hidden_dim,), s),
        # layer 1: input size = hidden_dim
        "w_ih1":  u(ks[5], (4 * hidden_dim, hidden_dim), s),
        "w_hh1":  u(ks[6], (4 * hidden_dim, hidden_dim), s),   # unused: h_prev == 0
        "b_ih1":  u(ks[7], (4 * hidden_dim,), s),
        "b_hh1":  u(ks[8], (4 * hidden_dim,), s),
        # fc
        "w_fc":   u(ks[9], (output_dim, hidden_dim), s),
        "b_fc":   u(ks[10], (output_dim,), s),
    }


def prepare_params(params, batch):
    """One-time pre-packing (hoisted out of the per-call hot path):
      * embedding table zero-padded to (V_pad128, E_pad8) for the one-hot gather,
      * per-layer gate weights packed [Wi|Wg|Wo|0] into a lane-dense slab and
        stacked with the fc weights into ONE weight blob,
      * biases (b_ih + b_hh, dead forget gate dropped) packed and pre-broadcast
        over the padded batch into ONE bias blob."""
    V, E = params["embed"].shape
    H = params["w_hh0"].shape[1]
    O = params["w_fc"].shape[0]

    B_pad = _round_up(max(batch, 1), 8)
    V_pad = _round_up(V, 128)
    E_pad = _round_up(E, 8)
    H_pad = _round_up(H, 8)
    G = _round_up(3 * H, 128)          # packed gate lane width [i|g|o|pad]
    O_pad = _round_up(O, 128)
    W = max(G, O_pad)                  # blob lane width

    embed_pad = (jnp.zeros((V_pad, E_pad), jnp.float32)
                 .at[:V, :E].set(params["embed"].astype(jnp.float32)))

    def pack_gates(w_ih, b_ih, b_hh, in_dim, in_rows):
        # PyTorch gate order [i, f, g, o]; forget gate dead (c_prev == 0) and
        # the recurrent matmul is zero (h_prev == 0), so only b_hh survives
        # from the recurrent path (folded into the bias).
        wi = w_ih[0 * H:1 * H].T
        wg = w_ih[2 * H:3 * H].T
        wo = w_ih[3 * H:4 * H].T
        wrow = jnp.zeros((in_rows, W), jnp.float32)
        wrow = wrow.at[:in_dim, 0 * H:1 * H].set(wi)
        wrow = wrow.at[:in_dim, 1 * H:2 * H].set(wg)
        wrow = wrow.at[:in_dim, 2 * H:3 * H].set(wo)
        b = b_ih + b_hh
        brow = jnp.zeros((W,), jnp.float32)
        brow = brow.at[0 * H:1 * H].set(b[0 * H:1 * H])
        brow = brow.at[1 * H:2 * H].set(b[2 * H:3 * H])
        brow = brow.at[2 * H:3 * H].set(b[3 * H:4 * H])
        return wrow, brow

    w0, b0 = pack_gates(params["w_ih0"], params["b_ih0"], params["b_hh0"], E, E_pad)
    w1, b1 = pack_gates(params["w_ih1"], params["b_ih1"], params["b_hh1"], H, H_pad)

    wfc = jnp.zeros((H_pad, W), jnp.float32).at[:H, :O].set(params["w_fc"].T)
    bfc = jnp.zeros((W,), jnp.float32).at[:O].set(params["b_fc"])

    w_blob = jnp.concatenate([w0, w1, wfc], axis=0)        # (E_pad + 2*H_pad, W)
    b_rows = jnp.stack([b0, b1, bfc], axis=0)              # (3, W)
    b_blob = jnp.broadcast_to(b_rows[:, None, :], (3, B_pad, W)).reshape(3 * B_pad, W)

    return {
        "embed": embed_pad, "w_blob": w_blob, "b_rows": b_rows, "b_blob": b_blob,
        "dims": dict(V=V, V_pad=V_pad, E=E, E_pad=E_pad, H=H, H_pad=H_pad,
                     O=O, O_pad=O_pad, W=W, B_pad=B_pad),
    }


def decoder_forward(x_tokens, prepped, hidden=None, cell=None):
    """JAX wrapper.  `hidden`/`cell` are accepted but UNUSED, matching the
    PyTorch module which calls self.lstm(x) without passing the state."""
    del hidden, cell
    d = prepped["dims"]
    H, W, O = d["H"], d["W"], d["O"]
    E_pad, H_pad = d["E_pad"], d["H_pad"]

    B = x_tokens.shape[0]
    B_pad = _round_up(max(B, 1), 8)

    # Pad batch to a sublane multiple; padded slots get an out-of-range token
    # id (-1), whose one-hot row is all zero -> zero embedding (no OOB reads).
    tok = jnp.full((B_pad, 1), -1, jnp.int32).at[:B, 0].set(x_tokens.astype(jnp.int32))

    b_blob = prepped["b_blob"]
    if b_blob.shape[0] != 3 * B_pad:       # rebuild for a different batch size
        b_blob = jnp.broadcast_to(prepped["b_rows"][:, None, :],
                                  (3, B_pad, W)).reshape(3 * B_pad, W)

    flops = 2 * B_pad * (d["V_pad"] * E_pad + E_pad * W + H * W + H * W)
    bytes_accessed = 4 * (tok.size + prepped["embed"].size + prepped["w_blob"].size
                          + b_blob.size + B_pad * W + B_pad * 4 * H)

    out_pad, hc = pl.pallas_call(
        functools.partial(decoder_kernel, hidden=H, e_rows=E_pad, h_rows=H_pad),
        out_shape=(
            jax.ShapeDtypeStruct((B_pad, W), jnp.float32),      # padded fc output
            jax.ShapeDtypeStruct((B_pad, 4 * H), jnp.float32),  # packed [h0|h1|c0|c1]
        ),
        in_specs=[pl.BlockSpec(memory_space=pltpu.MemorySpace.VMEM)] * 4,
        out_specs=(
            pl.BlockSpec(memory_space=pltpu.MemorySpace.VMEM),
            pl.BlockSpec(memory_space=pltpu.MemorySpace.VMEM),
        ),
        cost_estimate=pl.CostEstimate(
            flops=int(flops),
            transcendentals=int(8 * B_pad * H),
            bytes_accessed=int(bytes_accessed),
        ),
    )(tok, prepped["embed"], prepped["w_blob"], b_blob)

    # Layout plumbing only (cheap): unpad fc output, split packed state slab.
    output = out_pad[:B, :O]
    state = hc[:B].reshape(B, 4, H).transpose(1, 0, 2)     # (4, B, H) = [h0,h1,c0,c1]
    hidden_out = state[0:2]
    cell_out = state[2:4]
    return output, hidden_out, cell_out


def _reference_forward(x_tokens, params):
    """Pure-JAX reference mirroring the PyTorch semantics, for verification."""
    emb = jnp.take(params["embed"], x_tokens, axis=0)
    H = params["w_hh0"].shape[1]

    def cell(inp, w_ih, b_ih, b_hh):
        gates = inp @ w_ih.T + b_ih + b_hh   # h_prev = c_prev = 0
        i = jax.nn.sigmoid(gates[:, 0 * H:1 * H])
        g = jnp.tanh(gates[:, 2 * H:3 * H])
        o = jax.nn.sigmoid(gates[:, 3 * H:4 * H])
        c = i * g
        h = o * jnp.tanh(c)
        return h, c

    h0, c0 = cell(emb, params["w_ih0"], params["b_ih0"], params["b_hh0"])
    h1, c1 = cell(h0, params["w_ih1"], params["b_ih1"], params["b_hh1"])
    out = h1 @ params["w_fc"].T + params["b_fc"]
    return out, jnp.stack([h0, h1]), jnp.stack([c0, c1])


if __name__ == "__main__":
    # Small, shape-consistent config: vocab=50, embed=32, hidden=32, out=16.
    INPUT_DIM, EMBED_DIM, HIDDEN_DIM, OUTPUT_DIM = 50, 32, 32, 16
    BATCH = 8

    key = jax.random.PRNGKey(0)
    k_param, k_tok = jax.random.split(key)
    params = init_params(k_param, INPUT_DIM, EMBED_DIM, HIDDEN_DIM, OUTPUT_DIM)
    prepped = prepare_params(params, batch=BATCH)     # one-time pre-packing

    x = jax.random.randint(k_tok, (BATCH,), 0, INPUT_DIM, dtype=jnp.int32)
    hidden_in = jnp.zeros((2, BATCH, HIDDEN_DIM), jnp.float32)   # unused (see note)
    cell_in = jnp.zeros((2, BATCH, HIDDEN_DIM), jnp.float32)     # unused (see note)

    out, hidden, cell = decoder_forward(x, prepped, hidden_in, cell_in)
    jax.block_until_ready((out, hidden, cell))

    ref_out, ref_h, ref_c = _reference_forward(x, params)
    assert out.shape == (BATCH, OUTPUT_DIM)
    assert hidden.shape == (2, BATCH, HIDDEN_DIM)
    assert cell.shape == (2, BATCH, HIDDEN_DIM)
    assert jnp.allclose(out, ref_out, atol=1e-5, rtol=1e-5)
    assert jnp.allclose(hidden, ref_h, atol=1e-5, rtol=1e-5)
    assert jnp.allclose(cell, ref_c, atol=1e-5, rtol=1e-5)

    print("KERNEL_OK")
</pallas_src>

<mosaic_0001>
module attributes {stable_mosaic.version = 11 : i64} {
  func.func @decoder_kernel(%arg0: memref<8x1xi32, #tpu.memory_space<vmem>>, %arg1: memref<128x32xf32, #tpu.memory_space<vmem>>, %arg2: memref<96x128xf32, #tpu.memory_space<vmem>>, %arg3: memref<24x128xf32, #tpu.memory_space<vmem>>, %arg4: memref<8x128xf32, #tpu.memory_space<vmem>>, %arg5: memref<8x128xf32, #tpu.memory_space<vmem>>) attributes {dimension_semantics = [], scalar_prefetch = 0 : i64, scratch_operands = 0 : i64, tpu.core_type = #tpu.core_type<tc>} {
    %c0 = arith.constant 0 : index
    %c0_0 = arith.constant 0 : index
    %0 = vector.load %arg0[%c0, %c0_0] : memref<8x1xi32, #tpu.memory_space<vmem>>, vector<8x1xi32>
    %1 = tpu.iota {dimensions = array<i32: 1>} : vector<8x128xi32>
    %2 = vector.broadcast %0 : vector<8x1xi32> to vector<8x128xi32>
    %3 = arith.cmpi eq, %1, %2 : vector<8x128xi32>
    %4 = arith.extui %3 : vector<8x128xi1> to vector<8x128xi32>
    %5 = arith.sitofp %4 : vector<8x128xi32> to vector<8x128xf32>
    %c0_1 = arith.constant 0 : index
    %c0_2 = arith.constant 0 : index
    %6 = vector.load %arg1[%c0_1, %c0_2] : memref<128x32xf32, #tpu.memory_space<vmem>>, vector<128x32xf32>
    %cst = arith.constant dense<0.000000e+00> : vector<8x32xf32>
    %7 = tpu.matmul %5, %6, %cst {dimension_numbers = #tpu.dot_dimension_numbers<[1], [0], [0], [1], [0, 0, 1, 1], [], []>} : vector<8x128xf32>, vector<128x32xf32>, vector<8x32xf32> -> vector<8x32xf32>
    %c0_3 = arith.constant 0 : index
    %c0_4 = arith.constant 0 : index
    %8 = vector.load %arg2[%c0_3, %c0_4] : memref<96x128xf32, #tpu.memory_space<vmem>>, vector<32x128xf32>
    %c0_5 = arith.constant 0 : index
    %c0_6 = arith.constant 0 : index
    %9 = vector.load %arg3[%c0_5, %c0_6] : memref<24x128xf32, #tpu.memory_space<vmem>>, vector<8x128xf32>
    %cst_7 = arith.constant dense<0.000000e+00> : vector<8x128xf32>
    %10 = tpu.matmul %7, %8, %cst_7 {dimension_numbers = #tpu.dot_dimension_numbers<[1], [0], [0], [1], [0, 0, 1, 1], [], []>} : vector<8x32xf32>, vector<32x128xf32>, vector<8x128xf32> -> vector<8x128xf32>
    %11 = arith.addf %10, %9 : vector<8x128xf32>
    %12 = vector.extract_strided_slice %11 {offsets = [0, 0], sizes = [8, 32], strides = [1, 1]} : vector<8x128xf32> to vector<8x32xf32>
    %13 = vector.extract_strided_slice %11 {offsets = [0, 32], sizes = [8, 32], strides = [1, 1]} : vector<8x128xf32> to vector<8x32xf32>
    %14 = vector.extract_strided_slice %11 {offsets = [0, 64], sizes = [8, 32], strides = [1, 1]} : vector<8x128xf32> to vector<8x32xf32>
    %15 = math.absf %12 : vector<8x32xf32>
    %cst_8 = arith.constant 0.000000e+00 : f32
    %16 = vector.broadcast %cst_8 : f32 to vector<8x32xf32>
    %17 = arith.subf %16, %15 : vector<8x32xf32>
    %18 = math.exp %17 : vector<8x32xf32>
    %cst_9 = arith.constant 0.000000e+00 : f32
    %19 = vector.broadcast %cst_9 : f32 to vector<8x32xf32>
    %20 = arith.cmpf oge, %12, %19 : vector<8x32xf32>
    %cst_10 = arith.constant 1.000000e+00 : f32
    %21 = vector.broadcast %cst_10 : f32 to vector<8x32xf32>
    %22 = arith.addf %21, %18 : vector<8x32xf32>
    %cst_11 = arith.constant 1.000000e+00 : f32
    %23 = vector.broadcast %cst_11 : f32 to vector<8x32xf32>
    %24 = arith.divf %23, %22 : vector<8x32xf32>
    %cst_12 = arith.constant 1.000000e+00 : f32
    %25 = vector.broadcast %cst_12 : f32 to vector<8x32xf32>
    %26 = arith.addf %25, %18 : vector<8x32xf32>
    %27 = arith.divf %18, %26 : vector<8x32xf32>
    %28 = arith.select %20, %24, %27 : vector<8x32xi1>, vector<8x32xf32>
    %29 = math.tanh %13 : vector<8x32xf32>
    %30 = arith.mulf %28, %29 : vector<8x32xf32>
    %31 = math.absf %14 : vector<8x32xf32>
    %cst_13 = arith.constant 0.000000e+00 : f32
    %32 = vector.broadcast %cst_13 : f32 to vector<8x32xf32>
    %33 = arith.subf %32, %31 : vector<8x32xf32>
    %34 = math.exp %33 : vector<8x32xf32>
    %cst_14 = arith.constant 0.000000e+00 : f32
    %35 = vector.broadcast %cst_14 : f32 to vector<8x32xf32>
    %36 = arith.cmpf oge, %14, %35 : vector<8x32xf32>
    %cst_15 = arith.constant 1.000000e+00 : f32
    %37 = vector.broadcast %cst_15 : f32 to vector<8x32xf32>
    %38 = arith.addf %37, %34 : vector<8x32xf32>
    %cst_16 = arith.constant 1.000000e+00 : f32
    %39 = vector.broadcast %cst_16 : f32 to vector<8x32xf32>
    %40 = arith.divf %39, %38 : vector<8x32xf32>
    %cst_17 = arith.constant 1.000000e+00 : f32
    %41 = vector.broadcast %cst_17 : f32 to vector<8x32xf32>
    %42 = arith.addf %41, %34 : vector<8x32xf32>
    %43 = arith.divf %34, %42 : vector<8x32xf32>
    %44 = arith.select %36, %40, %43 : vector<8x32xi1>, vector<8x32xf32>
    %45 = math.tanh %30 : vector<8x32xf32>
    %46 = arith.mulf %44, %45 : vector<8x32xf32>
    %c32 = arith.constant 32 : index
    %c0_18 = arith.constant 0 : index
    %47 = vector.load %arg2[%c32, %c0_18] : memref<96x128xf32, #tpu.memory_space<vmem>>, vector<32x128xf32>
    %c8 = arith.constant 8 : index
    %c0_19 = arith.constant 0 : index
    %48 = vector.load %arg3[%c8, %c0_19] : memref<24x128xf32, #tpu.memory_space<vmem>>, vector<8x128xf32>
    %cst_20 = arith.constant dense<0.000000e+00> : vector<8x128xf32>
    %49 = tpu.matmul %46, %47, %cst_20 {dimension_numbers = #tpu.dot_dimension_numbers<[1], [0], [0], [1], [0, 0, 1, 1], [], []>} : vector<8x32xf32>, vector<32x128xf32>, vector<8x128xf32> -> vector<8x128xf32>
    %50 = arith.addf %49, %48 : vector<8x128xf32>
    %51 = vector.extract_strided_slice %50 {offsets = [0, 0], sizes = [8, 32], strides = [1, 1]} : vector<8x128xf32> to vector<8x32xf32>
    %52 = vector.extract_strided_slice %50 {offsets = [0, 32], sizes = [8, 32], strides = [1, 1]} : vector<8x128xf32> to vector<8x32xf32>
    %53 = vector.extract_strided_slice %50 {offsets = [0, 64], sizes = [8, 32], strides = [1, 1]} : vector<8x128xf32> to vector<8x32xf32>
    %54 = math.absf %51 : vector<8x32xf32>
    %cst_21 = arith.constant 0.000000e+00 : f32
    %55 = vector.broadcast %cst_21 : f32 to vector<8x32xf32>
    %56 = arith.subf %55, %54 : vector<8x32xf32>
    %57 = math.exp %56 : vector<8x32xf32>
    %cst_22 = arith.constant 0.000000e+00 : f32
    %58 = vector.broadcast %cst_22 : f32 to vector<8x32xf32>
    %59 = arith.cmpf oge, %51, %58 : vector<8x32xf32>
    %cst_23 = arith.constant 1.000000e+00 : f32
    %60 = vector.broadcast %cst_23 : f32 to vector<8x32xf32>
    %61 = arith.addf %60, %57 : vector<8x32xf32>
    %cst_24 = arith.constant 1.000000e+00 : f32
    %62 = vector.broadcast %cst_24 : f32 to vector<8x32xf32>
    %63 = arith.divf %62, %61 : vector<8x32xf32>
    %cst_25 = arith.constant 1.000000e+00 : f32
    %64 = vector.broadcast %cst_25 : f32 to vector<8x32xf32>
    %65 = arith.addf %64, %57 : vector<8x32xf32>
    %66 = arith.divf %57, %65 : vector<8x32xf32>
    %67 = arith.select %59, %63, %66 : vector<8x32xi1>, vector<8x32xf32>
    %68 = math.tanh %52 : vector<8x32xf32>
    %69 = arith.mulf %67, %68 : vector<8x32xf32>
    %70 = math.absf %53 : vector<8x32xf32>
    %cst_26 = arith.constant 0.000000e+00 : f32
    %71 = vector.broadcast %cst_26 : f32 to vector<8x32xf32>
    %72 = arith.subf %71, %70 : vector<8x32xf32>
    %73 = math.exp %72 : vector<8x32xf32>
    %cst_27 = arith.constant 0.000000e+00 : f32
    %74 = vector.broadcast %cst_27 : f32 to vector<8x32xf32>
    %75 = arith.cmpf oge, %53, %74 : vector<8x32xf32>
    %cst_28 = arith.constant 1.000000e+00 : f32
    %76 = vector.broadcast %cst_28 : f32 to vector<8x32xf32>
    %77 = arith.addf %76, %73 : vector<8x32xf32>
    %cst_29 = arith.constant 1.000000e+00 : f32
    %78 = vector.broadcast %cst_29 : f32 to vector<8x32xf32>
    %79 = arith.divf %78, %77 : vector<8x32xf32>
    %cst_30 = arith.constant 1.000000e+00 : f32
    %80 = vector.broadcast %cst_30 : f32 to vector<8x32xf32>
    %81 = arith.addf %80, %73 : vector<8x32xf32>
    %82 = arith.divf %73, %81 : vector<8x32xf32>
    %83 = arith.select %75, %79, %82 : vector<8x32xi1>, vector<8x32xf32>
    %84 = math.tanh %69 : vector<8x32xf32>
    %85 = arith.mulf %83, %84 : vector<8x32xf32>
    %c64 = arith.constant 64 : index
    %c0_31 = arith.constant 0 : index
    %86 = vector.load %arg2[%c64, %c0_31] : memref<96x128xf32, #tpu.memory_space<vmem>>, vector<32x128xf32>
    %cst_32 = arith.constant dense<0.000000e+00> : vector<8x128xf32>
    %87 = tpu.matmul %85, %86, %cst_32 {dimension_numbers = #tpu.dot_dimension_numbers<[1], [0], [0], [1], [0, 0, 1, 1], [], []>} : vector<8x32xf32>, vector<32x128xf32>, vector<8x128xf32> -> vector<8x128xf32>
    %c16 = arith.constant 16 : index
    %c0_33 = arith.constant 0 : index
    %88 = vector.load %arg3[%c16, %c0_33] : memref<24x128xf32, #tpu.memory_space<vmem>>, vector<8x128xf32>
    %89 = arith.addf %87, %88 : vector<8x128xf32>
    %c0_34 = arith.constant 0 : index
    %c0_35 = arith.constant 0 : index
    %90 = vector.load %arg4[%c0_34, %c0_35] : memref<8x128xf32, #tpu.memory_space<vmem>>, vector<8x128xf32>
    tpu.vector_store %arg4[%c0_34, %c0_35], %89 {strides = array<i32>} : memref<8x128xf32, #tpu.memory_space<vmem>>, vector<8x128xf32>,
    %91 = tpu.concatenate %46, %85, %30, %69 in 1 : vector<8x32xf32>, vector<8x32xf32>, vector<8x32xf32>, vector<8x32xf32> -> vector<8x128xf32>
    %c0_36 = arith.constant 0 : index
    %c0_37 = arith.constant 0 : index
    %92 = vector.load %arg5[%c0_36, %c0_37] : memref<8x128xf32, #tpu.memory_space<vmem>>, vector<8x128xf32>
    tpu.vector_store %arg5[%c0_36, %c0_37], %91 {strides = array<i32>} : memref<8x128xf32, #tpu.memory_space<vmem>>, vector<8x128xf32>,
    return
  }
}

</mosaic_0001>

<llo_original>
// kernel: tpu_custom_call.1
$region0: #{tpu_custom_call.1}
  #allocation0 [shape = 'u32[]', space=smem, size = 0x4, offset = 0x4, fixed_abs, tag = 'smem constant byte address 0x4 - core index']
  #allocation1 [shape = 'u32[144,128]{1,0:T(1,128)}', space=vmem, size = 0x12000, scoped, tag = 'internal scratch']
  %s0 = inlined_call_operand.vmem [shape: s32[8,1], index: 0, kind: input, shape index: {}]
  %s1 = inlined_call_operand.vmem [shape: f32[128,32], index: 1, kind: input, shape index: {}]
  %s2 = inlined_call_operand.vmem [shape: f32[96,128], index: 2, kind: input, shape index: {}]
  %s3 = inlined_call_operand.vmem [shape: f32[24,128], index: 3, kind: input, shape index: {}]
  %s4 = inlined_call_operand.hbm [shape: f32[8,128], index: 4, kind: output, shape index: {0}]
  %s5 = inlined_call_operand.hbm [shape: f32[8,128], index: 5, kind: output, shape index: {1}]
  %6 = xla_tuple %s4, %s5
  %s7 = sld [smem:[#allocation0]]
  $region34: #{tpu_custom_call.1} parent=0
    _
  %s9 = ssub.s32 1, %s7
  %s10 = scalar_select 0, %s9, %s7
  $region1: #{tpu_custom_call.1} parent=0
    #allocation2 [shape = 'u8[4096]{0}', space=vmem, size = 0x1000, scoped, tag = 'output window, operand 0, single buffered']
    #allocation3 [shape = 's32[1]{0}', space=sflag, size = 0x4, scoped, tag = 'scoped memory for tpu_custom_call.1']
    #allocation4 [shape = 'u8[4096]{0}', space=vmem, size = 0x1000, scoped, tag = 'output window, operand 1, single buffered']
    #allocation5 [shape = 's32[1]{0}', space=sflag, size = 0x4, scoped, tag = 'scoped memory for tpu_custom_call.1']
    %11 = vsyncpa [#allocation3], 0
    %12 = vsyncpa [#allocation5], 0
    // Predicated region
    $region2: #{tpu_custom_call.1} parent=1 // pred_check
      _
    $region3: #{tpu_custom_call.1} parent=1 // pred_check_branch
      %14 = sbr.rel (0) target = $region5
    $region4: #{tpu_custom_call.1} parent=1 // pred_region
      _
    $region5: #{tpu_custom_call.1} parent=1 // pred_fallthru
      _
    // Predicated region
    $region6: #{tpu_custom_call.1} parent=1 // pred_check
      _
    $region7: #{tpu_custom_call.1} parent=1 // pred_check_branch
      %16 = sbr.rel (0) target = $region9
    $region8: #{tpu_custom_call.1} parent=1 // pred_region
      _
    $region9: #{tpu_custom_call.1} parent=1 // pred_fallthru
      _
    // Predicated region
    $region10: #{tpu_custom_call.1} parent=1 // pred_check
      _
    $region11: #{tpu_custom_call.1} parent=1 // pred_check_branch
      %18 = sbr.rel (0) target = $region13
    $region12: #{tpu_custom_call.1} parent=1 // pred_region
      _
    $region13: #{tpu_custom_call.1} parent=1 // pred_fallthru
      _
    // Predicated region
    $region14: #{tpu_custom_call.1} parent=1 // pred_check
      _
    $region15: #{tpu_custom_call.1} parent=1 // pred_check_branch
      %20 = sbr.rel (0) target = $region17
    $region16: #{tpu_custom_call.1} parent=1 // pred_region
      _
    $region17: #{tpu_custom_call.1} parent=1 // pred_fallthru
      _
    %v21 = vld [vmem:[%s0] sm:$0xff]
    %v22 = vlaneseq
    %v23 = vand.u32 %v22, 127
    %24 = vset.pattern.permute.xlu0 0
    %25 = vperm.xlu0 %24, %v21
    %v26 = vpop.permute.xlu0 %25
    %vm27 = vcmp.eq.s32.totalorder %v23, %v26
    %v28 = vsel %vm27, 1, 0
    %v29 = vcvt.s32.f32 %v28
    %v30 = vld [vmem:[%s1] sm:$0xff]
    %v31 = vld [vmem:[%s1 + $0x8] sm:$0xff]
    %v32 = vld [vmem:[%s1 + $0x10] sm:$0xff]
    %v33 = vld [vmem:[%s1 + $0x18] sm:$0xff]
    %v34 = vld [vmem:[%s1 + $0x20] sm:$0xff]
    %v35 = vld [vmem:[%s1 + $0x28] sm:$0xff]
    %v36 = vld [vmem:[%s1 + $0x30] sm:$0xff]
    %v37 = vld [vmem:[%s1 + $0x38] sm:$0xff]
    %v38 = vld [vmem:[%s1 + $0x40] sm:$0xff]
    %v39 = vld [vmem:[%s1 + $0x48] sm:$0xff]
    %v40 = vld [vmem:[%s1 + $0x50] sm:$0xff]
    %v41 = vld [vmem:[%s1 + $0x58] sm:$0xff]
    %v42 = vld [vmem:[%s1 + $0x60] sm:$0xff]
    %v43 = vld [vmem:[%s1 + $0x68] sm:$0xff]
    %v44 = vld [vmem:[%s1 + $0x70] sm:$0xff]
    %v45 = vld [vmem:[%s1 + $0x78] sm:$0xff]
    %46 = vmatprep.subr.mxu0 0.0
    %47 = vmatpush1.msra.mxu0 %v45
    %48 = vmatprep.subr.mxu0 0.0
    %49 = vmatpush1.msra.mxu0 %v44
    %50 = vmatprep.subr.mxu0 0.0
    %51 = vmatpush1.msra.mxu0 %v43
    %52 = vmatprep.subr.mxu0 0.0
    %53 = vmatpush1.msra.mxu0 %v42
    %54 = vmatprep.subr.mxu0 0.0
    %55 = vmatpush1.msra.mxu0 %v41
    %56 = vmatprep.subr.mxu0 0.0
    %57 = vmatpush1.msra.mxu0 %v40
    %58 = vmatprep.subr.mxu0 0.0
    %59 = vmatpush1.msra.mxu0 %v39
    %60 = vmatprep.subr.mxu0 0.0
    %61 = vmatpush1.msra.mxu0 %v38
    %62 = vmatprep.subr.mxu0 0.0
    %63 = vmatpush1.msra.mxu0 %v37
    %64 = vmatprep.subr.mxu0 0.0
    %65 = vmatpush1.msra.mxu0 %v36
    %66 = vmatprep.subr.mxu0 0.0
    %67 = vmatpush1.msra.mxu0 %v35
    %68 = vmatprep.subr.mxu0 0.0
    %69 = vmatpush1.msra.mxu0 %v34
    %70 = vmatprep.subr.mxu0 0.0
    %71 = vmatpush1.msra.mxu0 %v33
    %72 = vmatprep.subr.mxu0 0.0
    %73 = vmatpush1.msra.mxu0 %v32
    %74 = vmatprep.subr.mxu0 0.0
    %75 = vmatpush1.msra.mxu0 %v31
    %76 = vmatprep.subr.mxu0 0.0
    %77 = vmatpush1.msra.mxu0 %v30
    %78 = vmatprep.subr.mxu0 0.0
    %79 = vmatpush2.msra.mxu0 0.0
    %80 = vmatprep.subr.mxu0 0.0
    %81 = vmatpush2.msra.mxu0 0.0
    %82 = vmatprep.subr.mxu0 0.0
    %83 = vmatpush2.msra.mxu0 0.0
    %84 = vmatprep.subr.mxu0 0.0
    %85 = vmatpush2.msra.mxu0 0.0
    %86 = vmatprep.subr.mxu0 0.0
    %87 = vmatpush2.msra.mxu0 0.0
    %88 = vmatprep.subr.mxu0 0.0
    %89 = vmatpush2.msra.mxu0 0.0
    %90 = vmatprep.subr.mxu0 0.0
    %91 = vmatpush2.msra.mxu0 0.0
    %92 = vmatprep.subr.mxu0 0.0
    %93 = vmatpush2.msra.mxu0 0.0
    %94 = vmatprep.subr.mxu0 0.0
    %95 = vmatpush2.msra.mxu0 0.0
    %96 = vmatprep.subr.mxu0 0.0
    %97 = vmatpush2.msra.mxu0 0.0
    %98 = vmatprep.subr.mxu0 0.0
    %99 = vmatpush2.msra.mxu0 0.0
    %100 = vmatprep.subr.mxu0 0.0
    %101 = vmatpush2.msra.mxu0 0.0
    %102 = vmatprep.subr.mxu0 0.0
    %103 = vmatpush2.msra.mxu0 0.0
    %104 = vmatprep.subr.mxu0 0.0
    %105 = vmatpush2.msra.mxu0 0.0
    %106 = vmatprep.subr.mxu0 0.0
    %107 = vmatpush2.msra.mxu0 0.0
    %108 = vmatprep.subr.mxu0 0.0
    %109 = vmatpush2.msra.mxu0 0.0
    %110 = vmatprep.mubr.f32.mxu0 0.0
    %111 = vmatmul.mubr.f32.gmra.mxu0 %v29
    %v112 = vpop.f32.mrf.mxu0
    %v113 = vadd.f32 0.0, %v112
    %v114 = vpop.f32.mrf.mxu0
    %115 = vdwg.mxu0
    %v116 = vld [vmem:[%s2] sm:$0xff]
    %v117 = vld [vmem:[%s2 + $0x8] sm:$0xff]
    %v118 = vld [vmem:[%s2 + $0x10] sm:$0xff]
    %v119 = vld [vmem:[%s2 + $0x18] sm:$0xff]
    %v120 = vld [vmem:[%s3] sm:$0xff]
    %vm121 = vcmask 261120
    %v123 = vsel %vm121, %v113, 0
    %125 = vmatprep.subr.mxu0 0.0
    %126 = vmatpush1.msra.mxu0 0.0
    %127 = vmatprep.subr.mxu0 0.0
    %128 = vmatpush1.msra.mxu0 0.0
    %129 = vmatprep.subr.mxu0 0.0
    %130 = vmatpush1.msra.mxu0 0.0
    %131 = vmatprep.subr.mxu0 0.0
    %132 = vmatpush1.msra.mxu0 0.0
    %133 = vmatprep.subr.mxu0 0.0
    %134 = vmatpush1.msra.mxu0 0.0
    %135 = vmatprep.subr.mxu0 0.0
    %136 = vmatpush1.msra.mxu0 0.0
    %137 = vmatprep.subr.mxu0 0.0
    %138 = vmatpush1.msra.mxu0 0.0
    %139 = vmatprep.subr.mxu0 0.0
    %140 = vmatpush1.msra.mxu0 0.0
    %141 = vmatprep.subr.mxu0 0.0
    %142 = vmatpush1.msra.mxu0 0.0
    %143 = vmatprep.subr.mxu0 0.0
    %144 = vmatpush1.msra.mxu0 0.0
    %145 = vmatprep.subr.mxu0 0.0
    %146 = vmatpush1.msra.mxu0 0.0
    %147 = vmatprep.subr.mxu0 0.0
    %148 = vmatpush1.msra.mxu0 0.0
    %149 = vmatprep.subr.mxu0 0.0
    %150 = vmatpush1.msra.mxu0 %v119
    %151 = vmatprep.subr.mxu0 0.0
    %152 = vmatpush1.msra.mxu0 %v118
    %153 = vmatprep.subr.mxu0 0.0
    %154 = vmatpush1.msra.mxu0 %v117
    %155 = vmatprep.subr.mxu0 0.0
    %156 = vmatpush1.msra.mxu0 %v116
    %157 = vmatprep.subr.mxu0 0.0
    %158 = vmatpush2.msra.mxu0 0.0
    %159 = vmatprep.subr.mxu0 0.0
    %160 = vmatpush2.msra.mxu0 0.0
    %161 = vmatprep.subr.mxu0 0.0
    %162 = vmatpush2.msra.mxu0 0.0
    %163 = vmatprep.subr.mxu0 0.0
    %164 = vmatpush2.msra.mxu0 0.0
    %165 = vmatprep.subr.mxu0 0.0
    %166 = vmatpush2.msra.mxu0 0.0
    %167 = vmatprep.subr.mxu0 0.0
    %168 = vmatpush2.msra.mxu0 0.0
    %169 = vmatprep.subr.mxu0 0.0
    %170 = vmatpush2.msra.mxu0 0.0
    %171 = vmatprep.subr.mxu0 0.0
    %172 = vmatpush2.msra.mxu0 0.0
    %173 = vmatprep.subr.mxu0 0.0
    %174 = vmatpush2.msra.mxu0 0.0
    %175 = vmatprep.subr.mxu0 0.0
    %176 = vmatpush2.msra.mxu0 0.0
    %177 = vmatprep.subr.mxu0 0.0
    %178 = vmatpush2.msra.mxu0 0.0
    %179 = vmatprep.subr.mxu0 0.0
    %180 = vmatpush2.msra.mxu0 0.0
    %181 = vmatprep.subr.mxu0 0.0
    %182 = vmatpush2.msra.mxu0 0.0
    %183 = vmatprep.subr.mxu0 0.0
    %184 = vmatpush2.msra.mxu0 0.0
    %185 = vmatprep.subr.mxu0 0.0
    %186 = vmatpush2.msra.mxu0 0.0
    %187 = vmatprep.subr.mxu0 0.0
    %188 = vmatpush2.msra.mxu0 0.0
    %189 = vmatprep.mubr.f32.mxu0 0.0
    %190 = vmatmul.mubr.f32.gmra.mxu0 %v123
    %v191 = vpop.f32.mrf.mxu0
    %v192 = vadd.f32 %v120, %v191
    %v193 = vpop.f32.mrf.mxu0
    %194 = vdwg.mxu0
    %v195 = vand.u32 2147483647, %v192
    %v196 = vsub.f32 0.0, %v195
    %v197 = vmul.f32 %v196, 1.442695
    %v198 = vpow.pop %v197
    %vm199 = vcmp.ge.f32.partialorder %v192, 0.0
    %v200 = vadd.f32 %v198, 1.0
    %v201 = vrcp.pop %v200
    %v202 = vmul.f32 1.0, %v201
    %v203 = vmul.f32 %v198, %v201
    %v204 = vsel %vm199, %v202, %v203
    %v205 = vtanh.pop %v192
    %207 = vrot.lane.b32.xlu0 %v205, 96
    %v208 = vpop.permute.xlu0 %207
    %v210 = vmul.f32 %v204, %v208
    %v211 = vtanh.pop %v210
    %213 = vrot.lane.b32.xlu0 %v211, 64
    %v214 = vpop.permute.xlu0 %213
    %v216 = vmul.f32 %v204, %v214
    %v217 = vld [vmem:[%s2 + $0x20] sm:$0xff]
    %v218 = vld [vmem:[%s2 + $0x28] sm:$0xff]
    %v219 = vld [vmem:[%s2 + $0x30] sm:$0xff]
    %v220 = vld [vmem:[%s2 + $0x38] sm:$0xff]
    %v221 = vld [vmem:[%s3 + $0x8] sm:$0xff]
    %223 = vrot.lane.b32.xlu0 %v216, 64
    %v224 = vpop.permute.xlu0 %223
    %v225 = vsel %vm121, %v224, 0
    %227 = vmatprep.subr.mxu0 0.0
    %228 = vmatpush1.msra.mxu0 0.0
    %229 = vmatprep.subr.mxu0 0.0
    %230 = vmatpush1.msra.mxu0 0.0
    %231 = vmatprep.subr.mxu0 0.0
    %232 = vmatpush1.msra.mxu0 0.0
    %233 = vmatprep.subr.mxu0 0.0
    %234 = vmatpush1.msra.mxu0 0.0
    %235 = vmatprep.subr.mxu0 0.0
    %236 = vmatpush1.msra.mxu0 0.0
    %237 = vmatprep.subr.mxu0 0.0
    %238 = vmatpush1.msra.mxu0 0.0
    %239 = vmatprep.subr.mxu0 0.0
    %240 = vmatpush1.msra.mxu0 0.0
    %241 = vmatprep.subr.mxu0 0.0
    %242 = vmatpush1.msra.mxu0 0.0
    %243 = vmatprep.subr.mxu0 0.0
    %244 = vmatpush1.msra.mxu0 0.0
    %245 = vmatprep.subr.mxu0 0.0
    %246 = vmatpush1.msra.mxu0 0.0
    %247 = vmatprep.subr.mxu0 0.0
    %248 = vmatpush1.msra.mxu0 0.0
    %249 = vmatprep.subr.mxu0 0.0
    %250 = vmatpush1.msra.mxu0 0.0
    %251 = vmatprep.subr.mxu0 0.0
    %252 = vmatpush1.msra.mxu0 %v220
    %253 = vmatprep.subr.mxu0 0.0
    %254 = vmatpush1.msra.mxu0 %v219
    %255 = vmatprep.subr.mxu0 0.0
    %256 = vmatpush1.msra.mxu0 %v218
    %257 = vmatprep.subr.mxu0 0.0
    %258 = vmatpush1.msra.mxu0 %v217
    %259 = vmatprep.subr.mxu0 0.0
    %260 = vmatpush2.msra.mxu0 0.0
    %261 = vmatprep.subr.mxu0 0.0
    %262 = vmatpush2.msra.mxu0 0.0
    %263 = vmatprep.subr.mxu0 0.0
    %264 = vmatpush2.msra.mxu0 0.0
    %265 = vmatprep.subr.mxu0 0.0
    %266 = vmatpush2.msra.mxu0 0.0
    %267 = vmatprep.subr.mxu0 0.0
    %268 = vmatpush2.msra.mxu0 0.0
    %269 = vmatprep.subr.mxu0 0.0
    %270 = vmatpush2.msra.mxu0 0.0
    %271 = vmatprep.subr.mxu0 0.0
    %272 = vmatpush2.msra.mxu0 0.0
    %273 = vmatprep.subr.mxu0 0.0
    %274 = vmatpush2.msra.mxu0 0.0
    %275 = vmatprep.subr.mxu0 0.0
    %276 = vmatpush2.msra.mxu0 0.0
    %277 = vmatprep.subr.mxu0 0.0
    %278 = vmatpush2.msra.mxu0 0.0
    %279 = vmatprep.subr.mxu0 0.0
    %280 = vmatpush2.msra.mxu0 0.0
    %281 = vmatprep.subr.mxu0 0.0
    %282 = vmatpush2.msra.mxu0 0.0
    %283 = vmatprep.subr.mxu0 0.0
    %284 = vmatpush2.msra.mxu0 0.0
    %285 = vmatprep.subr.mxu0 0.0
    %286 = vmatpush2.msra.mxu0 0.0
    %287 = vmatprep.subr.mxu0 0.0
    %288 = vmatpush2.msra.mxu0 0.0
    %289 = vmatprep.subr.mxu0 0.0
    %290 = vmatpush2.msra.mxu0 0.0
    %291 = vmatprep.mubr.f32.mxu0 0.0
    %292 = vmatmul.mubr.f32.gmra.mxu0 %v225
    %v293 = vpop.f32.mrf.mxu0
    %v294 = vadd.f32 %v221, %v293
    %v295 = vpop.f32.mrf.mxu0
    %296 = vdwg.mxu0
    %v297 = vand.u32 2147483647, %v294
    %v298 = vsub.f32 0.0, %v297
    %v299 = vmul.f32 %v298, 1.442695
    %v300 = vpow.pop %v299
    %vm301 = vcmp.ge.f32.partialorder %v294, 0.0
    %v302 = vadd.f32 %v300, 1.0
    %v303 = vrcp.pop %v302
    %v304 = vmul.f32 1.0, %v303
    %v305 = vmul.f32 %v300, %v303
    %v306 = vsel %vm301, %v304, %v305
    %v307 = vtanh.pop %v294
    %309 = vrot.lane.b32.xlu0 %v307, 96
    %v310 = vpop.permute.xlu0 %309
    %v312 = vmul.f32 %v306, %v310
    %v313 = vtanh.pop %v312
    %315 = vrot.lane.b32.xlu0 %v313, 64
    %v316 = vpop.permute.xlu0 %315
    %v318 = vmul.f32 %v306, %v316
    %v319 = vld [vmem:[%s2 + $0x40] sm:$0xff]
    %v320 = vld [vmem:[%s2 + $0x48] sm:$0xff]
    %v321 = vld [vmem:[%s2 + $0x50] sm:$0xff]
    %v322 = vld [vmem:[%s2 + $0x58] sm:$0xff]
    %v323 = vld [vmem:[%s3 + $0x10] sm:$0xff]
    %325 = vrot.lane.b32.xlu0 %v318, 64
    %v326 = vpop.permute.xlu0 %325
    %v327 = vsel %vm121, %v326, 0
    %329 = vmatprep.subr.mxu0 0.0
    %330 = vmatpush1.msra.mxu0 0.0
    %331 = vmatprep.subr.mxu0 0.0
    %332 = vmatpush1.msra.mxu0 0.0
    %333 = vmatprep.subr.mxu0 0.0
    %334 = vmatpush1.msra.mxu0 0.0
    %335 = vmatprep.subr.mxu0 0.0
    %336 = vmatpush1.msra.mxu0 0.0
    %337 = vmatprep.subr.mxu0 0.0
    %338 = vmatpush1.msra.mxu0 0.0
    %339 = vmatprep.subr.mxu0 0.0
    %340 = vmatpush1.msra.mxu0 0.0
    %341 = vmatprep.subr.mxu0 0.0
    %342 = vmatpush1.msra.mxu0 0.0
    %343 = vmatprep.subr.mxu0 0.0
    %344 = vmatpush1.msra.mxu0 0.0
    %345 = vmatprep.subr.mxu0 0.0
    %346 = vmatpush1.msra.mxu0 0.0
    %347 = vmatprep.subr.mxu0 0.0
    %348 = vmatpush1.msra.mxu0 0.0
    %349 = vmatprep.subr.mxu0 0.0
    %350 = vmatpush1.msra.mxu0 0.0
    %351 = vmatprep.subr.mxu0 0.0
    %352 = vmatpush1.msra.mxu0 0.0
    %353 = vmatprep.subr.mxu0 0.0
    %354 = vmatpush1.msra.mxu0 %v322
    %355 = vmatprep.subr.mxu0 0.0
    %356 = vmatpush1.msra.mxu0 %v321
    %357 = vmatprep.subr.mxu0 0.0
    %358 = vmatpush1.msra.mxu0 %v320
    %359 = vmatprep.subr.mxu0 0.0
    %360 = vmatpush1.msra.mxu0 %v319
    %361 = vmatprep.subr.mxu0 0.0
    %362 = vmatpush2.msra.mxu0 0.0
    %363 = vmatprep.subr.mxu0 0.0
    %364 = vmatpush2.msra.mxu0 0.0
    %365 = vmatprep.subr.mxu0 0.0
    %366 = vmatpush2.msra.mxu0 0.0
    %367 = vmatprep.subr.mxu0 0.0
    %368 = vmatpush2.msra.mxu0 0.0
    %369 = vmatprep.subr.mxu0 0.0
    %370 = vmatpush2.msra.mxu0 0.0
    %371 = vmatprep.subr.mxu0 0.0
    %372 = vmatpush2.msra.mxu0 0.0
    %373 = vmatprep.subr.mxu0 0.0
    %374 = vmatpush2.msra.mxu0 0.0
    %375 = vmatprep.subr.mxu0 0.0
    %376 = vmatpush2.msra.mxu0 0.0
    %377 = vmatprep.subr.mxu0 0.0
    %378 = vmatpush2.msra.mxu0 0.0
    %379 = vmatprep.subr.mxu0 0.0
    %380 = vmatpush2.msra.mxu0 0.0
    %381 = vmatprep.subr.mxu0 0.0
    %382 = vmatpush2.msra.mxu0 0.0
    %383 = vmatprep.subr.mxu0 0.0
    %384 = vmatpush2.msra.mxu0 0.0
    %385 = vmatprep.subr.mxu0 0.0
    %386 = vmatpush2.msra.mxu0 0.0
    %387 = vmatprep.subr.mxu0 0.0
    %388 = vmatpush2.msra.mxu0 0.0
    %389 = vmatprep.subr.mxu0 0.0
    %390 = vmatpush2.msra.mxu0 0.0
    %391 = vmatprep.subr.mxu0 0.0
    %392 = vmatpush2.msra.mxu0 0.0
    %393 = vmatprep.mubr.f32.mxu0 0.0
    %394 = vmatmul.mubr.f32.gmra.mxu0 %v327
    %v395 = vpop.f32.mrf.mxu0
    %v396 = vadd.f32 %v323, %v395
    %v397 = vpop.f32.mrf.mxu0
    %398 = vdwg.mxu0
    %399 = vst [vmem:[#allocation2] sm:$0xff] %v396
    %401 = vrot.lane.b32.xlu0 %v318, 96
    %v402 = vpop.permute.xlu0 %401
    %405 = vrot.lane.b32.xlu0 %v210, 64
    %v406 = vpop.permute.xlu0 %405
    %409 = vrot.lane.b32.xlu0 %v312, 96
    %v410 = vpop.permute.xlu0 %409
    %v412 = vsel %vm121, %v224, %v402
    %vm413 = vcmask 523264
    %v414 = vsel %vm413, %v412, %v406
    %vm415 = vcmask 785408
    %v416 = vsel %vm415, %v414, %v410
    %417 = vst [vmem:[#allocation4] sm:$0xff] %v416
    // Predicated region
    $region18: #{tpu_custom_call.1} parent=1 // pred_check
      _
    $region19: #{tpu_custom_call.1} parent=1 // pred_check_branch
      %419 = sbr.rel (0) target = $region21
    $region20: #{tpu_custom_call.1} parent=1 // pred_region
      %s421 = ssub.s32 128, 128
      %422 = vsyncadd [#allocation3], %s421
      %s424 = sshll.u32 [#allocation2], 4
      %s425 = int_to_ptr.vmem [resolvable:$true] %s424
      %427 = dma.vmem_to_hbm [thread:$0]  %s425, 128, %s4, [#allocation3]
    $region21: #{tpu_custom_call.1} parent=1 // pred_fallthru
      _
    // Predicated region
    $region22: #{tpu_custom_call.1} parent=1 // pred_check
      _
    $region23: #{tpu_custom_call.1} parent=1 // pred_check_branch
      %429 = sbr.rel (0) target = $region25
    $region24: #{tpu_custom_call.1} parent=1 // pred_region
      %s431 = ssub.s32 128, 128
      %432 = vsyncadd [#allocation5], %s431
      %s434 = sshll.u32 [#allocation4], 4
      %s435 = int_to_ptr.vmem [resolvable:$true] %s434
      %437 = dma.vmem_to_hbm [thread:$0]  %s435, 128, %s5, [#allocation5]
    $region25: #{tpu_custom_call.1} parent=1 // pred_fallthru
      _
    // Predicated region
    $region26: #{tpu_custom_call.1} parent=1 // pred_check
      _
    $region27: #{tpu_custom_call.1} parent=1 // pred_check_branch
      %439 = sbr.rel (0) target = $region29
    $region28: #{tpu_custom_call.1} parent=1 // pred_region
      %440 = dma.done [#allocation3], 128
    $region29: #{tpu_custom_call.1} parent=1 // pred_fallthru
      _
    // Predicated region
    $region30: #{tpu_custom_call.1} parent=1 // pred_check
      _
    $region31: #{tpu_custom_call.1} parent=1 // pred_check_branch
      %442 = sbr.rel (0) target = $region33
    $region32: #{tpu_custom_call.1} parent=1 // pred_region
      %443 = dma.done [#allocation5], 128
    $region33: #{tpu_custom_call.1} parent=1 // pred_fallthru
      _
    %444 = vsyncpa [#allocation3], 1
    %445 = vsyncpa [#allocation5], 1

</llo_original>
